<compile_context>
chip_gen: v7x
topology: tpu7x:2x2x1
jax: 0.10.0
libtpu: 0.0.40
codegen_flags: <defaults>
</compile_context>

<pallas_src>
import jax
import jax.numpy as jnp
from jax.experimental import pallas as pl
from jax.experimental.pallas import tpu as pltpu


def _linear_bias_kernel(x_ref, wt_ref, b_ref, o_ref, acc_ref):
    # x_ref: (tm, tk), wt_ref: (tk, tn) [pre-transposed to K-major],
    # b_ref: (1, tn), o_ref: (tm, tn), acc_ref: (tm, tn) f32 scratch.
    k = pl.program_id(2)

    @pl.when(k == 0)
    def _():
        acc_ref[...] = jnp.zeros_like(acc_ref)

    acc_ref[...] += jnp.dot(x_ref[...], wt_ref[...],
                            preferred_element_type=jnp.float32)

    @pl.when(k == pl.num_programs(2) - 1)
    def _():
        # Bias added exactly once, fused with the finalize/cast.
        o_ref[...] = (acc_ref[...]
                      + b_ref[...].astype(jnp.float32)).astype(o_ref.dtype)


def _linear_nobias_kernel(x_ref, wt_ref, o_ref, acc_ref):
    k = pl.program_id(2)

    @pl.when(k == 0)
    def _():
        acc_ref[...] = jnp.zeros_like(acc_ref)

    acc_ref[...] += jnp.dot(x_ref[...], wt_ref[...],
                            preferred_element_type=jnp.float32)

    @pl.when(k == pl.num_programs(2) - 1)
    def _():
        o_ref[...] = acc_ref[...].astype(o_ref.dtype)


def _round_up(v, m):
    return ((v + m - 1) // m) * m


def linear_final(x, weight, bias=None, *, tm=512, tn=512, tk=1024,
                 compute_dtype=None):
    """F.linear semantics: x [..., K], weight [N, K], bias [N] -> [..., N].

    compute_dtype: optionally cast x/W (e.g. jnp.bfloat16) for the MXU path;
    accumulation stays f32 and the output keeps x's original dtype.
    """
    orig_lead = x.shape[:-1]
    K = x.shape[-1]
    N = weight.shape[0]
    out_dtype = x.dtype

    x2 = x.reshape(-1, K)
    M = x2.shape[0]

    if compute_dtype is not None:
        x2 = x2.astype(compute_dtype)
        weight = weight.astype(compute_dtype)
    cdtype = x2.dtype
    dsize = jnp.dtype(cdtype).itemsize
    osize = jnp.dtype(out_dtype).itemsize

    # One-time transpose to [K, N]: the in-kernel dot then needs no per-tile
    # RHS transpose (XLU) -- a single amortized XLA op on the weight.
    wt = weight.T

    # --- Tile selection ------------------------------------------------------
    # tm: second-to-last dims -> multiple of 8; default 512 keeps the v6e/v7x
    #     256x256 MXU full for large M.
    # tn: lane dim -> multiple of 128 (256-multiple by default).
    # tk: must divide Kp = round_up(K, 128) exactly so only lane-alignment
    #     zeros are ever padded on the reduction axis.
    tm = min(tm, _round_up(M, 8))
    tn = min(tn, _round_up(N, 128))
    Kp = _round_up(K, 128)
    tk_target = max(128, min(tk, Kp))
    tk = 128
    for cand in range(tk_target - tk_target % 128, 127, -128):
        if Kp % cand == 0:
            tk = cand
            break

    # K-only zero padding (correctness of the accumulation); M/N remainders are
    # handled by masked partial edge blocks via pl.cdiv grid extents.
    if Kp != K:
        x2 = jnp.pad(x2, ((0, 0), (0, Kp - K)))
        wt = jnp.pad(wt, ((0, Kp - K), (0, 0)))

    grid_m = pl.cdiv(M, tm)
    grid_n = pl.cdiv(N, tn)
    grid_k = Kp // tk
    # TODO(synk): on v7x, if profiling shows single-core occupancy, force an
    # even split of the leading parallel axis (or use core_map) across the 2 TCs.
    grid = (grid_m, grid_n, grid_k)

    # VMEM budget: double-buffered x/W/out tiles + f32 accumulator (+ bias).
    vmem_bytes = (2 * (tm * tk + tk * tn) * dsize
                  + 2 * tm * tn * osize
                  + tm * tn * 4
                  + 2 * tn * 4)
    vmem_limit = min(max(int(vmem_bytes * 1.25) + (2 << 20), 32 << 20),
                     60 << 20)  # stay under v7x's 64 MiB per-TC VMEM

    # HBM traffic including reuse: x re-read once per N tile, W once per M tile.
    cost = pl.CostEstimate(
        flops=2 * M * N * Kp,
        transcendentals=0,
        bytes_accessed=(M * Kp * dsize * grid_n
                        + Kp * N * dsize * grid_m
                        + M * N * osize
                        + (N * 4 if bias is not None else 0)))

    in_specs = [
        pl.BlockSpec((tm, tk), lambda i, j, k: (i, k)),   # x  [M, Kp]
        pl.BlockSpec((tk, tn), lambda i, j, k: (k, j)),   # Wt [Kp, N]
    ]
    args = [x2, wt]
    if bias is not None:
        in_specs.append(pl.BlockSpec((1, tn), lambda i, j, k: (0, j)))
        args.append(bias.reshape(1, N))
        kernel = _linear_bias_kernel
    else:
        kernel = _linear_nobias_kernel

    out = pl.pallas_call(
        kernel,
        out_shape=jax.ShapeDtypeStruct((M, N), out_dtype),
        grid_spec=pltpu.PrefetchScalarGridSpec(
            num_scalar_prefetch=0,
            grid=grid,
            in_specs=in_specs,
            out_specs=pl.BlockSpec((tm, tn), lambda i, j, k: (i, j)),
            scratch_shapes=[pltpu.VMEM((tm, tn), jnp.float32)],
        ),
        compiler_params=pltpu.CompilerParams(
            dimension_semantics=("parallel", "parallel", "arbitrary"),
            vmem_limit_bytes=vmem_limit),
        cost_estimate=cost,
    )(*args)

    return out.reshape(*orig_lead, N)


if __name__ == "__main__":
    key = jax.random.PRNGKey(0)

    # --- Small-shape check consistent with the module (batch=2, seq=8,
    #     in_features=32, out_features=16): exercises K padding (32 -> 128),
    #     partial (masked) N / output blocks, and the leading reshape.
    in_features, out_features = 32, 16
    batch, seq = 2, 8
    kx, kw, kb = jax.random.split(key, 3)
    x = jax.random.normal(kx, (batch, seq, in_features), dtype=jnp.float32)
    weight = jax.random.normal(kw, (out_features, in_features),
                               dtype=jnp.float32) * (1.0 / in_features ** 0.5)
    bias = jax.random.normal(kb, (out_features,), dtype=jnp.float32) * 0.1

    out = linear_final(x, weight, bias)
    jax.block_until_ready(out)
    ref = x.reshape(-1, in_features) @ weight.T + bias
    ref = ref.reshape(batch, seq, out_features)
    assert out.shape == (batch, seq, out_features)
    assert jnp.allclose(out, ref, atol=1e-5, rtol=1e-5)

    # --- Multi-tile / multi-K-step check (exercises the accumulator across
    #     K steps, the bias-once guard, and a 4x2x3 grid).
    M2, K2, N2 = 256, 384, 256
    k1, k2, k3 = jax.random.split(jax.random.PRNGKey(1), 3)
    x2 = jax.random.normal(k1, (M2, K2), dtype=jnp.float32)
    w2 = jax.random.normal(k2, (N2, K2), dtype=jnp.float32) * (1.0 / K2 ** 0.5)
    b2 = jax.random.normal(k3, (N2,), dtype=jnp.float32) * 0.1
    out2 = linear_final(x2, w2, b2, tm=64, tn=128, tk=128)
    jax.block_until_ready(out2)
    ref2 = x2 @ w2.T + b2
    assert out2.shape == (M2, N2)
    assert jnp.allclose(out2, ref2, atol=1e-4, rtol=1e-4)

    # --- No-bias + ragged M/N/K check with default (large) tiles: partial
    #     edge blocks on all axes, K padded 200 -> 256, no bias DMA.
    M3, K3, N3 = 300, 200, 130
    k4, k5 = jax.random.split(jax.random.PRNGKey(2), 2)
    x3 = jax.random.normal(k4, (M3, K3), dtype=jnp.float32)
    w3 = jax.random.normal(k5, (N3, K3), dtype=jnp.float32) * (1.0 / K3 ** 0.5)
    out3 = linear_final(x3, w3, None)
    jax.block_until_ready(out3)
    ref3 = x3 @ w3.T
    assert out3.shape == (M3, N3)
    assert jnp.allclose(out3, ref3, atol=1e-4, rtol=1e-4)

    # --- bf16 MXU path with f32 accumulation (loose tolerance vs bf16 ref).
    out4 = linear_final(x2, w2, b2, compute_dtype=jnp.bfloat16)
    jax.block_until_ready(out4)
    ref4 = jnp.dot(x2.astype(jnp.bfloat16), w2.T.astype(jnp.bfloat16),
                   preferred_element_type=jnp.float32) + b2
    assert jnp.allclose(out4, ref4, atol=1e-2, rtol=1e-2)

    print("KERNEL_OK")
</pallas_src>

<mosaic_0001>
module attributes {stable_mosaic.version = 11 : i64} {
  func.func @_linear_bias_kernel(%arg0: i32, %arg1: i32, %arg2: i32, %arg3: memref<16x128xf32, #tpu.memory_space<vmem>>, %arg4: memref<128x128xf32, #tpu.memory_space<vmem>>, %arg5: memref<1x128xf32, #tpu.memory_space<vmem>>, %arg6: memref<16x128xf32, #tpu.memory_space<vmem>>, %arg7: memref<16x128xf32, #tpu.memory_space<vmem>>) attributes {dimension_semantics = [#tpu.dimension_semantics<parallel>, #tpu.dimension_semantics<parallel>, #tpu.dimension_semantics<arbitrary>], iteration_bounds = array<i64: 1, 1, 1>, scalar_prefetch = 0 : i64, scratch_operands = 1 : i64, tpu.core_type = #tpu.core_type<tc>, window_params = [{transform_indices = @transform_0, window_bounds = array<i64: 16, 128>}, {transform_indices = @transform_1, window_bounds = array<i64: 128, 128>}, {transform_indices = @transform_2, window_bounds = array<i64: 1, 128>}, {transform_indices = @transform_3, window_bounds = array<i64: 16, 128>}]} {
    %c0_i32 = arith.constant 0 : i32
    %0 = arith.cmpi eq, %arg2, %c0_i32 : i32
    %1 = arith.extui %0 : i1 to i32
    %c0_i32_0 = arith.constant 0 : i32
    %2 = arith.cmpi ne, %1, %c0_i32_0 : i32
    scf.if %2 {
      %cst_10 = arith.constant 0.000000e+00 : f32
      %12 = vector.broadcast %cst_10 : f32 to vector<16x128xf32>
      %c0_11 = arith.constant 0 : index
      %c0_12 = arith.constant 0 : index
      %13 = vector.load %arg7[%c0_11, %c0_12] : memref<16x128xf32, #tpu.memory_space<vmem>>, vector<16x128xf32>
      tpu.vector_store %arg7[%c0_11, %c0_12], %12 {strides = array<i32>} : memref<16x128xf32, #tpu.memory_space<vmem>>, vector<16x128xf32>,
    } else {
    }
    %c0 = arith.constant 0 : index
    %c0_1 = arith.constant 0 : index
    %3 = vector.load %arg7[%c0, %c0_1] : memref<16x128xf32, #tpu.memory_space<vmem>>, vector<16x128xf32>
    %c0_2 = arith.constant 0 : index
    %c0_3 = arith.constant 0 : index
    %4 = vector.load %arg3[%c0_2, %c0_3] : memref<16x128xf32, #tpu.memory_space<vmem>>, vector<16x128xf32>
    %c0_4 = arith.constant 0 : index
    %c0_5 = arith.constant 0 : index
    %5 = vector.load %arg4[%c0_4, %c0_5] : memref<128x128xf32, #tpu.memory_space<vmem>>, vector<128x128xf32>
    %cst = arith.constant dense<0.000000e+00> : vector<16x128xf32>
    %6 = tpu.matmul %4, %5, %cst {dimension_numbers = #tpu.dot_dimension_numbers<[1], [0], [0], [1], [0, 0, 1, 1], [], []>} : vector<16x128xf32>, vector<128x128xf32>, vector<16x128xf32> -> vector<16x128xf32>
    %7 = arith.addf %3, %6 : vector<16x128xf32>
    %c0_6 = arith.constant 0 : index
    %c0_7 = arith.constant 0 : index
    %8 = vector.load %arg7[%c0_6, %c0_7] : memref<16x128xf32, #tpu.memory_space<vmem>>, vector<16x128xf32>
    tpu.vector_store %arg7[%c0_6, %c0_7], %7 {strides = array<i32>} : memref<16x128xf32, #tpu.memory_space<vmem>>, vector<16x128xf32>,
    %c0_i32_8 = arith.constant 0 : i32
    %9 = arith.cmpi eq, %arg2, %c0_i32_8 : i32
    %10 = arith.extui %9 : i1 to i32
    %c0_i32_9 = arith.constant 0 : i32
    %11 = arith.cmpi ne, %10, %c0_i32_9 : i32
    scf.if %11 {
      %c0_10 = arith.constant 0 : index
      %c0_11 = arith.constant 0 : index
      %12 = vector.load %arg7[%c0_10, %c0_11] : memref<16x128xf32, #tpu.memory_space<vmem>>, vector<16x128xf32>
      %c0_12 = arith.constant 0 : index
      %c0_13 = arith.constant 0 : index
      %13 = vector.load %arg5[%c0_12, %c0_13] : memref<1x128xf32, #tpu.memory_space<vmem>>, vector<1x128xf32>
      %14 = vector.broadcast %13 : vector<1x128xf32> to vector<16x128xf32>
      %15 = arith.addf %12, %14 : vector<16x128xf32>
      %c0_14 = arith.constant 0 : index
      %c0_15 = arith.constant 0 : index
      %16 = vector.load %arg6[%c0_14, %c0_15] : memref<16x128xf32, #tpu.memory_space<vmem>>, vector<16x128xf32>
      tpu.vector_store %arg6[%c0_14, %c0_15], %15 {strides = array<i32>} : memref<16x128xf32, #tpu.memory_space<vmem>>, vector<16x128xf32>,
    } else {
    }
    return
  }
  func.func @transform_0(%arg0: i32, %arg1: i32, %arg2: i32) -> (i32, i32) {
    %c0_i32 = arith.constant 0 : i32
    return %arg0, %arg2 : i32, i32
  }
  func.func @transform_1(%arg0: i32, %arg1: i32, %arg2: i32) -> (i32, i32) {
    %c0_i32 = arith.constant 0 : i32
    return %arg2, %arg1 : i32, i32
  }
  func.func @transform_2(%arg0: i32, %arg1: i32, %arg2: i32) -> (i32, i32) {
    %c0_i32 = arith.constant 0 : i32
    %c0_i32_0 = arith.constant 0 : i32
    return %c0_i32, %arg1 : i32, i32
  }
  func.func @transform_3(%arg0: i32, %arg1: i32, %arg2: i32) -> (i32, i32) {
    %c0_i32 = arith.constant 0 : i32
    return %arg0, %arg1 : i32, i32
  }
}

</mosaic_0001>

<llo_original>
// kernel: tpu_custom_call.1
$region0: #{tpu_custom_call.1}
  #allocation0 [shape = 'u32[]', space=smem, size = 0x4, offset = 0x4, fixed_abs, tag = 'smem constant byte address 0x4 - core index']
  #allocation1 [shape = 'u32[144,128]{1,0:T(1,128)}', space=vmem, size = 0x12000, scoped, tag = 'internal scratch']
  #allocation2 [shape = 'f32[16,128]{1,0:T(8,128)}', space=vmem, size = 0x2000, scoped, tag = 'scratch operand']
  %s0 = inlined_call_operand.vmem [shape: f32[16,128], index: 0, kind: input, shape index: {}]
  %s1 = inlined_call_operand.vmem [shape: f32[128,16], index: 1, kind: input, shape index: {}]
  %s2 = inlined_call_operand.vmem [shape: f32[1,16], index: 2, kind: input, shape index: {}]
  %s3 = inlined_call_operand.hbm [shape: f32[16,16], index: 3, kind: output, shape index: {}]
  %s4 = sld [smem:[#allocation0]]
  $region30: #{tpu_custom_call.1} parent=0
    _
  %s6 = ssub.s32 1, %s4
  %s7 = scalar_select 0, %s6, %s4
  $region1: #{tpu_custom_call.1} parent=0
    #allocation3 [shape = 'u8[8192]{0}', space=vmem, size = 0x2000, scoped, tag = 'output window, operand 0, single buffered']
    #allocation4 [shape = 's32[1]{0}', space=sflag, size = 0x4, scoped, tag = 'scoped memory for tpu_custom_call.1']
    %8 = vsyncpa [#allocation4], 0
    // Predicated region
    $region2: #{tpu_custom_call.1} parent=1 // pred_check
      _
    $region3: #{tpu_custom_call.1} parent=1 // pred_check_branch
      %10 = sbr.rel (0) target = $region5
    $region4: #{tpu_custom_call.1} parent=1 // pred_region
      _
    $region5: #{tpu_custom_call.1} parent=1 // pred_fallthru
      _
    // Predicated region
    $region6: #{tpu_custom_call.1} parent=1 // pred_check
      _
    $region7: #{tpu_custom_call.1} parent=1 // pred_check_branch
      %12 = sbr.rel (0) target = $region9
    $region8: #{tpu_custom_call.1} parent=1 // pred_region
      _
    $region9: #{tpu_custom_call.1} parent=1 // pred_fallthru
      _
    // Predicated region
    $region10: #{tpu_custom_call.1} parent=1 // pred_check
      _
    $region11: #{tpu_custom_call.1} parent=1 // pred_check_branch
      %14 = sbr.rel (0) target = $region13
    $region12: #{tpu_custom_call.1} parent=1 // pred_region
      _
    $region13: #{tpu_custom_call.1} parent=1 // pred_fallthru
      _
    %p15 = scmp.eq.s32.totalorder 0, 0
    // Predicated region
    $region14: #{tpu_custom_call.1} parent=1 // pred_check
      %p16 = pneg %p15
    $region15: #{tpu_custom_call.1} parent=1 // pred_check_branch
      %18 = sbr.rel (%p16) target = $region17
    $region16: #{tpu_custom_call.1} parent=1 // pred_region
      %19 = vst [vmem:[#allocation2] sm:$0xff] 0.0
      %20 = vst [vmem:[#allocation2 + $0x8] sm:$0xff] 0.0
    $region17: #{tpu_custom_call.1} parent=1 // pred_fallthru
      _
    %v21 = vld [vmem:[#allocation2] sm:$0xff]
    %v22 = vld [vmem:[#allocation2 + $0x8] sm:$0xff]
    %v23 = vld [vmem:[%s0] sm:$0xff]
    %v24 = vld [vmem:[%s0 + $0x8] sm:$0xff]
    %v25 = vld [vmem:[%s1] sm:$0xff]
    %v26 = vld [vmem:[%s1 + $0x8] sm:$0xff]
    %v27 = vld [vmem:[%s1 + $0x10] sm:$0xff]
    %v28 = vld [vmem:[%s1 + $0x18] sm:$0xff]
    %v29 = vld [vmem:[%s1 + $0x20] sm:$0xff]
    %v30 = vld [vmem:[%s1 + $0x28] sm:$0xff]
    %v31 = vld [vmem:[%s1 + $0x30] sm:$0xff]
    %v32 = vld [vmem:[%s1 + $0x38] sm:$0xff]
    %v33 = vld [vmem:[%s1 + $0x40] sm:$0xff]
    %v34 = vld [vmem:[%s1 + $0x48] sm:$0xff]
    %v35 = vld [vmem:[%s1 + $0x50] sm:$0xff]
    %v36 = vld [vmem:[%s1 + $0x58] sm:$0xff]
    %v37 = vld [vmem:[%s1 + $0x60] sm:$0xff]
    %v38 = vld [vmem:[%s1 + $0x68] sm:$0xff]
    %v39 = vld [vmem:[%s1 + $0x70] sm:$0xff]
    %v40 = vld [vmem:[%s1 + $0x78] sm:$0xff]
    %41 = vmatprep.subr.mxu0 0.0
    %42 = vmatpush1.msra.mxu0 %v25
    %43 = vmatprep.subr.mxu0 0.0
    %44 = vmatpush1.msra.mxu0 %v26
    %45 = vmatprep.subr.mxu0 0.0
    %46 = vmatpush1.msra.mxu0 %v27
    %47 = vmatprep.subr.mxu0 0.0
    %48 = vmatpush1.msra.mxu0 %v28
    %49 = vmatprep.subr.mxu0 0.0
    %50 = vmatpush1.msra.mxu0 %v29
    %51 = vmatprep.subr.mxu0 0.0
    %52 = vmatpush1.msra.mxu0 %v30
    %53 = vmatprep.subr.mxu0 0.0
    %54 = vmatpush1.msra.mxu0 %v31
    %55 = vmatprep.subr.mxu0 0.0
    %56 = vmatpush1.msra.mxu0 %v32
    %57 = vmatprep.subr.mxu0 0.0
    %58 = vmatpush1.msra.mxu0 %v33
    %59 = vmatprep.subr.mxu0 0.0
    %60 = vmatpush1.msra.mxu0 %v34
    %61 = vmatprep.subr.mxu0 0.0
    %62 = vmatpush1.msra.mxu0 %v35
    %63 = vmatprep.subr.mxu0 0.0
    %64 = vmatpush1.msra.mxu0 %v36
    %65 = vmatprep.subr.mxu0 0.0
    %66 = vmatpush1.msra.mxu0 %v37
    %67 = vmatprep.subr.mxu0 0.0
    %68 = vmatpush1.msra.mxu0 %v38
    %69 = vmatprep.subr.mxu0 0.0
    %70 = vmatpush1.msra.mxu0 %v39
    %71 = vmatprep.subr.mxu0 0.0
    %72 = vmatpush1.msra.mxu0 %v40
    %73 = vmatprep.subr.mxu0 0.0
    %74 = vmatpush1.msra.mxu0 0.0
    %75 = vmatprep.subr.mxu0 0.0
    %76 = vmatpush1.msra.mxu0 0.0
    %77 = vmatprep.subr.mxu0 0.0
    %78 = vmatpush1.msra.mxu0 0.0
    %79 = vmatprep.subr.mxu0 0.0
    %80 = vmatpush1.msra.mxu0 0.0
    %81 = vmatprep.subr.mxu0 0.0
    %82 = vmatpush1.msra.mxu0 0.0
    %83 = vmatprep.subr.mxu0 0.0
    %84 = vmatpush1.msra.mxu0 0.0
    %85 = vmatprep.subr.mxu0 0.0
    %86 = vmatpush1.msra.mxu0 0.0
    %87 = vmatprep.subr.mxu0 0.0
    %88 = vmatpush1.msra.mxu0 0.0
    %89 = vmatprep.subr.mxu0 0.0
    %90 = vmatpush1.msra.mxu0 0.0
    %91 = vmatprep.subr.mxu0 0.0
    %92 = vmatpush1.msra.mxu0 0.0
    %93 = vmatprep.subr.mxu0 0.0
    %94 = vmatpush1.msra.mxu0 0.0
    %95 = vmatprep.subr.mxu0 0.0
    %96 = vmatpush1.msra.mxu0 0.0
    %97 = vmatprep.subr.mxu0 0.0
    %98 = vmatpush1.msra.mxu0 0.0
    %99 = vmatprep.subr.mxu0 0.0
    %100 = vmatpush1.msra.mxu0 0.0
    %101 = vmatprep.subr.mxu0 0.0
    %102 = vmatpush1.msra.mxu0 0.0
    %103 = vmatprep.subr.mxu0 0.0
    %104 = vmatpush1.msra.mxu0 0.0
    %105 = vmatprep.mubr.f32.mxu0 0.0
    %106 = vmatmul.mubr.f32.gmra.mrb[0].mxu0 %v23
    %v107 = vpop.f32.mrb[0].mxu0
    %v108 = vadd.f32 0.0, %v107
    %v109 = vpop.f32.mrb[0].mxu0
    %110 = vmatprep.mubr.f32.mxu0 0.0
    %111 = vmatmul.mubr.f32.gmra.mrb[0].mxu0 %v24
    %v112 = vpop.f32.mrb[0].mxu0
    %v113 = vadd.f32 0.0, %v112
    %v114 = vpop.f32.mrb[0].mxu0
    %115 = vdwg.mxu0
    %v116 = vadd.f32 %v21, %v108
    %v117 = vadd.f32 %v22, %v113
    %118 = vst [vmem:[#allocation2] sm:$0xff] %v116
    %119 = vst [vmem:[#allocation2 + $0x8] sm:$0xff] %v117
    // Predicated region
    $region18: #{tpu_custom_call.1} parent=1 // pred_check
      %p120 = pneg %p15
    $region19: #{tpu_custom_call.1} parent=1 // pred_check_branch
      %122 = sbr.rel (%p120) target = $region21
    $region20: #{tpu_custom_call.1} parent=1 // pred_region
      %v123 = vld [vmem:[#allocation2] sm:$0xff]
      %v124 = vld [vmem:[#allocation2 + $0x8] sm:$0xff]
      %v125 = vld [vmem:[%s2] sm:$0x1]
      %v127 = vlaneseq
      %v128 = vshrl.u32 %v127, 7
      %v129 = vsub.s32 0, %v128
      %v130 = vrot.slane %v125, %v129
      %v132 = vadd.f32 %v123, %v130
      %v133 = vadd.f32 %v124, %v130
      %134 = vst [vmem:[#allocation3] sm:$0xff] %v132
      %135 = vst [vmem:[#allocation3 + $0x8] sm:$0xff] %v133
    $region21: #{tpu_custom_call.1} parent=1 // pred_fallthru
      _
    // Predicated region
    $region22: #{tpu_custom_call.1} parent=1 // pred_check
      _
    $region23: #{tpu_custom_call.1} parent=1 // pred_check_branch
      %137 = sbr.rel (0) target = $region25
    $region24: #{tpu_custom_call.1} parent=1 // pred_region
      %s139 = ssub.s32 256, 256
      %140 = vsyncadd [#allocation4], %s139
      %s141 = sshll.u32 [#allocation3], 4
      %s142 = int_to_ptr.vmem [resolvable:$true] %s141
      %147 = dma.vmem_to_hbm [thread:$0]  %s142, 256, %s3, [#allocation4], 128, 128, 8
    $region25: #{tpu_custom_call.1} parent=1 // pred_fallthru
      _
    // Predicated region
    $region26: #{tpu_custom_call.1} parent=1 // pred_check
      _
    $region27: #{tpu_custom_call.1} parent=1 // pred_check_branch
      %149 = sbr.rel (0) target = $region29
    $region28: #{tpu_custom_call.1} parent=1 // pred_region
      %150 = dma.done [#allocation4], 256
    $region29: #{tpu_custom_call.1} parent=1 // pred_fallthru
      _
    %151 = vsyncpa [#allocation4], 1

</llo_original>
